<compile_context>
chip_gen: v6e
topology: v6e:2x2x1
jax: 0.10.0
libtpu: 0.0.40
codegen_flags: <defaults>
</compile_context>

<pallas_src>
import jax
import jax.numpy as jnp
from jax.experimental import pallas as pl
from jax.experimental.pallas import tpu as pltpu


NEG_SLOPE = 0.01  # nn.LeakyReLU default


def _leaky_relu(x):
    return jnp.where(x > 0, x, NEG_SLOPE * x)


def aggregator_kernel(a_ref, ego_k_ref, ego_row_ref, wcat_ref, bcat_ref,
                      o_ref, side_acc):
    # a_ref:       (tm, tk)    tile of A_in (possibly bf16)
    # ego_k_ref:   (tk, D)     contraction-side tile of ego (possibly bf16)
    # ego_row_ref: (tm, D)     row tile of ego (f32, epilogue only)
    # wcat_ref:    (2D, 2O)    block-diagonal [[W1, 0], [0, W2]]
    # bcat_ref:    (1, 2O)     [b1 | b2]
    # o_ref:       (tm, O)
    # side_acc:    (tm, D)     f32 accumulator for side = A @ ego
    k = pl.program_id(1)

    @pl.when(k == 0)
    def _():
        side_acc[...] = jnp.zeros_like(side_acc)

    # Partial contraction: side[i-tile] += A[i-tile, k-tile] @ ego[k-tile]
    side_acc[...] += jnp.dot(a_ref[...], ego_k_ref[...],
                             preferred_element_type=jnp.float32)

    @pl.when(k == pl.num_programs(1) - 1)
    def _():
        side = side_acc[...]
        ego = ego_row_ref[...].astype(jnp.float32)
        # Fused epilogue: one (tm, 2D) x (2D, 2O) MXU matmul instead of two
        # lane-sparse D=O=32 matmuls.
        zcat = jnp.concatenate([ego + side, ego * side], axis=-1)
        y = jnp.dot(zcat, wcat_ref[...], preferred_element_type=jnp.float32)
        y = _leaky_relu(y + bcat_ref[...])
        out_dim = o_ref.shape[-1]
        # TODO(synk): message_dropout implemented as identity (eval mode); training-mode
        # dropout would need pltpu.prng_seed / prng_random_bits + inverted scaling.
        o_ref[...] = (y[:, :out_dim] + y[:, out_dim:]).astype(o_ref.dtype)


def _round_up(x, m):
    return ((x + m - 1) // m) * m


def aggregator_forward(ego, a_in, w1, b1, w2, b2, *,
                       tm=256, tk=512, stream_dtype=None):
    """ego: (N, D) f32; a_in: (N, N); w1/w2: (D, O) pre-transposed; b1/b2: (1, O)."""
    N, D = ego.shape
    O = w1.shape[1]
    assert a_in.shape == (N, N)
    assert w1.shape == (D, O) and w2.shape == (D, O)

    # Clamp tiles for small problems, preserving (8, 128) legality.
    tm = max(8, min(tm, _round_up(N, 8)))
    tk = max(128, min(tk, _round_up(N, 128)))

    n_row = pl.cdiv(N, tm)
    n_k = pl.cdiv(N, tk)
    nr = n_row * tm           # padded output / A-row extent
    nc = n_k * tk             # padded contraction extent
    ne = max(nr, nc)          # padded ego rows (serves both row- and k-tiles)

    f32 = jnp.float32
    a = a_in.astype(f32)
    if nr != N or nc != N:
        a = jnp.pad(a, ((0, nr - N), (0, nc - N)))
    ego_pad = ego.astype(f32)
    if ne != N:
        ego_pad = jnp.pad(ego_pad, ((0, ne - N), (0, 0)))

    # Dominant HBM stream (A + contraction-side ego) optionally downcast to bf16;
    # the accumulation stays f32 (preferred_element_type in the kernel).
    if stream_dtype is not None:
        a = a.astype(stream_dtype)
        ego_stream = ego_pad.astype(stream_dtype)
    else:
        ego_stream = ego_pad
    ego_row = ego_pad  # f32 copy for the elementwise / epilogue path

    # Block-diagonal fused epilogue weight [[W1, 0], [0, W2]] and [b1 | b2].
    wcat = jnp.zeros((2 * D, 2 * O), f32)
    wcat = wcat.at[:D, :O].set(w1.astype(f32)).at[D:, O:].set(w2.astype(f32))
    bcat = jnp.concatenate([b1.astype(f32).reshape(1, O),
                            b2.astype(f32).reshape(1, O)], axis=-1)

    # VMEM budget: double-buffered inputs/outputs + accumulator, with headroom.
    itemsize = jnp.dtype(a.dtype).itemsize
    est = (2 * (tm * tk * itemsize + tk * D * itemsize + tm * D * 4
                + 4 * D * O * 4 + tm * O * 4)
           + tm * D * 4 + (1 << 20))
    vmem_limit = int(min(max(2 * est, 32 << 20), 64 << 20))

    out = pl.pallas_call(
        aggregator_kernel,
        out_shape=jax.ShapeDtypeStruct((nr, O), f32),
        grid_spec=pltpu.PrefetchScalarGridSpec(
            num_scalar_prefetch=0,
            grid=(n_row, n_k),                                   # reduction axis last
            in_specs=[
                pl.BlockSpec((tm, tk), lambda i, k: (i, k)),     # A tile
                pl.BlockSpec((tk, D), lambda i, k: (k, 0)),      # ego (rhs of A@ego)
                pl.BlockSpec((tm, D), lambda i, k: (i, 0)),      # ego row tile (f32)
                pl.BlockSpec((2 * D, 2 * O), lambda i, k: (0, 0)),  # fused W
                pl.BlockSpec((1, 2 * O), lambda i, k: (0, 0)),      # fused b
            ],
            out_specs=pl.BlockSpec((tm, O), lambda i, k: (i, 0)),
            scratch_shapes=[pltpu.VMEM((tm, D), jnp.float32)],
        ),
        compiler_params=pltpu.CompilerParams(
            dimension_semantics=("parallel", "arbitrary"),
            vmem_limit_bytes=vmem_limit),
    )(a, ego_stream, ego_row, wcat, bcat)
    return out[:N]


def _xavier_uniform(key, fan_in, fan_out):
    # nn.init.xavier_uniform_ on a (out, in) Linear weight; stored transposed (in, out).
    limit = (6.0 / (fan_in + fan_out)) ** 0.5
    return jax.random.uniform(key, (fan_in, fan_out), jnp.float32, -limit, limit)


def _reference(ego, a_in, w1, b1, w2, b2):
    side = a_in @ ego
    sum_emb = jax.nn.leaky_relu((ego + side) @ w1 + b1, NEG_SLOPE)
    bi_emb = jax.nn.leaky_relu((ego * side) @ w2 + b2, NEG_SLOPE)
    return bi_emb + sum_emb


if __name__ == "__main__":
    key = jax.random.PRNGKey(0)
    k_ego, k_a, k_w1, k_b1, k_w2, k_b2 = jax.random.split(key, 6)

    N = 300          # n_users + n_entities (ragged: exercises the padding path)
    in_dim = 32
    out_dim = 32

    ego = jax.random.normal(k_ego, (N, in_dim), jnp.float32)
    # synthetic (dense) adjacency; torch.sparse matmul has identical dense semantics
    a_in = jax.random.uniform(k_a, (N, N), jnp.float32) * (1.0 / N)

    w1 = _xavier_uniform(k_w1, in_dim, out_dim)
    w2 = _xavier_uniform(k_w2, in_dim, out_dim)
    b_limit = 1.0 / (in_dim ** 0.5)
    b1 = jax.random.uniform(k_b1, (1, out_dim), jnp.float32, -b_limit, b_limit)
    b2 = jax.random.uniform(k_b2, (1, out_dim), jnp.float32, -b_limit, b_limit)

    ref = _reference(ego, a_in, w1, b1, w2, b2)

    # f32 stream (exact path): grid (3, 3) after padding -> exercises K accumulation.
    out = aggregator_forward(ego, a_in, w1, b1, w2, b2, tm=128, tk=128)
    out = jax.block_until_ready(out)
    assert out.shape == (N, out_dim)
    assert jnp.allclose(out, ref, atol=1e-4, rtol=1e-4), "f32 mismatch vs JAX reference"

    # bf16 A/ego stream (halves dominant HBM traffic); f32 accumulation, looser tol.
    out_bf16 = aggregator_forward(ego, a_in, w1, b1, w2, b2, tm=128, tk=128,
                                  stream_dtype=jnp.bfloat16)
    out_bf16 = jax.block_until_ready(out_bf16)
    assert jnp.allclose(out_bf16, ref, atol=3e-2, rtol=3e-2), "bf16 mismatch vs reference"

    print("KERNEL_OK")
</pallas_src>

<mosaic_0001>
module attributes {stable_mosaic.version = 11 : i64} {
  func.func @aggregator_kernel(%arg0: i32, %arg1: i32, %arg2: memref<128x128xf32, #tpu.memory_space<vmem>>, %arg3: memref<128x32xf32, #tpu.memory_space<vmem>>, %arg4: memref<128x32xf32, #tpu.memory_space<vmem>>, %arg5: memref<64x64xf32, #tpu.memory_space<vmem>>, %arg6: memref<1x64xf32, #tpu.memory_space<vmem>>, %arg7: memref<128x32xf32, #tpu.memory_space<vmem>>, %arg8: memref<128x32xf32, #tpu.memory_space<vmem>>) attributes {dimension_semantics = [#tpu.dimension_semantics<parallel>, #tpu.dimension_semantics<arbitrary>], iteration_bounds = array<i64: 3, 3>, scalar_prefetch = 0 : i64, scratch_operands = 1 : i64, tpu.core_type = #tpu.core_type<tc>, window_params = [{transform_indices = @transform_0, window_bounds = array<i64: 128, 128>}, {transform_indices = @transform_1, window_bounds = array<i64: 128, 32>}, {transform_indices = @transform_2, window_bounds = array<i64: 128, 32>}, {pipeline_mode = #tpu.pipeline_mode<synchronous>, transform_indices = @transform_3, window_bounds = array<i64: 64, 64>}, {pipeline_mode = #tpu.pipeline_mode<synchronous>, transform_indices = @transform_4, window_bounds = array<i64: 1, 64>}, {transform_indices = @transform_5, window_bounds = array<i64: 128, 32>}]} {
    %c0_i32 = arith.constant 0 : i32
    %0 = arith.cmpi eq, %arg1, %c0_i32 : i32
    %1 = arith.extui %0 : i1 to i32
    %c0_i32_0 = arith.constant 0 : i32
    %2 = arith.cmpi ne, %1, %c0_i32_0 : i32
    scf.if %2 {
      %cst_9 = arith.constant 0.000000e+00 : f32
      %12 = vector.broadcast %cst_9 : f32 to vector<128x32xf32>
      %c0_10 = arith.constant 0 : index
      %c0_11 = arith.constant 0 : index
      %13 = vector.load %arg8[%c0_10, %c0_11] : memref<128x32xf32, #tpu.memory_space<vmem>>, vector<128x32xf32>
      tpu.vector_store %arg8[%c0_10, %c0_11], %12 {strides = array<i32>} : memref<128x32xf32, #tpu.memory_space<vmem>>, vector<128x32xf32>,
    } else {
    }
    %c0 = arith.constant 0 : index
    %c0_1 = arith.constant 0 : index
    %3 = vector.load %arg8[%c0, %c0_1] : memref<128x32xf32, #tpu.memory_space<vmem>>, vector<128x32xf32>
    %c0_2 = arith.constant 0 : index
    %c0_3 = arith.constant 0 : index
    %4 = vector.load %arg2[%c0_2, %c0_3] : memref<128x128xf32, #tpu.memory_space<vmem>>, vector<128x128xf32>
    %c0_4 = arith.constant 0 : index
    %c0_5 = arith.constant 0 : index
    %5 = vector.load %arg3[%c0_4, %c0_5] : memref<128x32xf32, #tpu.memory_space<vmem>>, vector<128x32xf32>
    %cst = arith.constant dense<0.000000e+00> : vector<128x32xf32>
    %6 = tpu.matmul %4, %5, %cst {dimension_numbers = #tpu.dot_dimension_numbers<[1], [0], [0], [1], [0, 0, 1, 1], [], []>} : vector<128x128xf32>, vector<128x32xf32>, vector<128x32xf32> -> vector<128x32xf32>
    %7 = arith.addf %3, %6 : vector<128x32xf32>
    %c0_6 = arith.constant 0 : index
    %c0_7 = arith.constant 0 : index
    %8 = vector.load %arg8[%c0_6, %c0_7] : memref<128x32xf32, #tpu.memory_space<vmem>>, vector<128x32xf32>
    tpu.vector_store %arg8[%c0_6, %c0_7], %7 {strides = array<i32>} : memref<128x32xf32, #tpu.memory_space<vmem>>, vector<128x32xf32>,
    %c2_i32 = arith.constant 2 : i32
    %9 = arith.cmpi eq, %arg1, %c2_i32 : i32
    %10 = arith.extui %9 : i1 to i32
    %c0_i32_8 = arith.constant 0 : i32
    %11 = arith.cmpi ne, %10, %c0_i32_8 : i32
    scf.if %11 {
      %c0_9 = arith.constant 0 : index
      %c0_10 = arith.constant 0 : index
      %12 = vector.load %arg8[%c0_9, %c0_10] : memref<128x32xf32, #tpu.memory_space<vmem>>, vector<128x32xf32>
      %c0_11 = arith.constant 0 : index
      %c0_12 = arith.constant 0 : index
      %13 = vector.load %arg4[%c0_11, %c0_12] : memref<128x32xf32, #tpu.memory_space<vmem>>, vector<128x32xf32>
      %14 = arith.addf %13, %12 : vector<128x32xf32>
      %15 = arith.mulf %13, %12 : vector<128x32xf32>
      %16 = tpu.concatenate %14, %15 in 1 : vector<128x32xf32>, vector<128x32xf32> -> vector<128x64xf32>
      %c0_13 = arith.constant 0 : index
      %c0_14 = arith.constant 0 : index
      %17 = vector.load %arg5[%c0_13, %c0_14] : memref<64x64xf32, #tpu.memory_space<vmem>>, vector<64x64xf32>
      %cst_15 = arith.constant dense<0.000000e+00> : vector<128x64xf32>
      %18 = tpu.matmul %16, %17, %cst_15 {dimension_numbers = #tpu.dot_dimension_numbers<[1], [0], [0], [1], [0, 0, 1, 1], [], []>} : vector<128x64xf32>, vector<64x64xf32>, vector<128x64xf32> -> vector<128x64xf32>
      %c0_16 = arith.constant 0 : index
      %c0_17 = arith.constant 0 : index
      %19 = vector.load %arg6[%c0_16, %c0_17] : memref<1x64xf32, #tpu.memory_space<vmem>>, vector<1x64xf32>
      %20 = vector.broadcast %19 : vector<1x64xf32> to vector<128x64xf32>
      %21 = arith.addf %18, %20 : vector<128x64xf32>
      %cst_18 = arith.constant 0.000000e+00 : f32
      %22 = vector.broadcast %cst_18 : f32 to vector<128x64xf32>
      %23 = arith.cmpf ogt, %21, %22 : vector<128x64xf32>
      %cst_19 = arith.constant 0.00999999977 : f32
      %24 = vector.broadcast %cst_19 : f32 to vector<128x64xf32>
      %25 = arith.mulf %24, %21 : vector<128x64xf32>
      %26 = arith.select %23, %21, %25 : vector<128x64xi1>, vector<128x64xf32>
      %27 = vector.extract_strided_slice %26 {offsets = [0, 0], sizes = [128, 32], strides = [1, 1]} : vector<128x64xf32> to vector<128x32xf32>
      %28 = vector.extract_strided_slice %26 {offsets = [0, 32], sizes = [128, 32], strides = [1, 1]} : vector<128x64xf32> to vector<128x32xf32>
      %29 = arith.addf %27, %28 : vector<128x32xf32>
      %c0_20 = arith.constant 0 : index
      %c0_21 = arith.constant 0 : index
      %30 = vector.load %arg7[%c0_20, %c0_21] : memref<128x32xf32, #tpu.memory_space<vmem>>, vector<128x32xf32>
      tpu.vector_store %arg7[%c0_20, %c0_21], %29 {strides = array<i32>} : memref<128x32xf32, #tpu.memory_space<vmem>>, vector<128x32xf32>,
    } else {
    }
    return
  }
  func.func @transform_0(%arg0: i32, %arg1: i32) -> (i32, i32) {
    %c0_i32 = arith.constant 0 : i32
    return %arg0, %arg1 : i32, i32
  }
  func.func @transform_1(%arg0: i32, %arg1: i32) -> (i32, i32) {
    %c0_i32 = arith.constant 0 : i32
    %c0_i32_0 = arith.constant 0 : i32
    return %arg1, %c0_i32 : i32, i32
  }
  func.func @transform_2(%arg0: i32, %arg1: i32) -> (i32, i32) {
    %c0_i32 = arith.constant 0 : i32
    %c0_i32_0 = arith.constant 0 : i32
    return %arg0, %c0_i32 : i32, i32
  }
  func.func @transform_3(%arg0: i32, %arg1: i32) -> (i32, i32) {
    %c0_i32 = arith.constant 0 : i32
    %c0_i32_0 = arith.constant 0 : i32
    %c0_i32_1 = arith.constant 0 : i32
    return %c0_i32, %c0_i32_0 : i32, i32
  }
  func.func @transform_4(%arg0: i32, %arg1: i32) -> (i32, i32) {
    %c0_i32 = arith.constant 0 : i32
    %c0_i32_0 = arith.constant 0 : i32
    %c0_i32_1 = arith.constant 0 : i32
    return %c0_i32, %c0_i32_0 : i32, i32
  }
  func.func @transform_5(%arg0: i32, %arg1: i32) -> (i32, i32) {
    %c0_i32 = arith.constant 0 : i32
    %c0_i32_0 = arith.constant 0 : i32
    return %arg0, %c0_i32 : i32, i32
  }
}

</mosaic_0001>

<llo_original>
// kernel: tpu_custom_call.1
$region0: #{tpu_custom_call.1}
  #allocation0 [shape = 'u32[]', space=smem, size = 0x4, offset = 0x4, fixed_abs, tag = 'smem constant byte address 0x4 - core index']
  #allocation1 [shape = 'u32[144,128]{1,0:T(1,128)}', space=vmem, size = 0x12000, scoped, tag = 'internal scratch']
  #allocation2 [shape = 'f32[128,32]{1,0:T(8,128)}', space=vmem, size = 0x10000, scoped, tag = 'scratch operand']
  %s0 = inlined_call_operand.hbm [shape: f32[384,384], index: 0, kind: input, shape index: {}]
  %s1 = inlined_call_operand.vmem [shape: f32[384,32], index: 1, kind: input, shape index: {}]
  %s2 = inlined_call_operand.vmem [shape: f32[384,32], index: 2, kind: input, shape index: {}]
  %s3 = inlined_call_operand.vmem [shape: f32[64,64], index: 3, kind: input, shape index: {}]
  %s4 = inlined_call_operand.vmem [shape: f32[1,64], index: 4, kind: input, shape index: {}]
  %s5 = inlined_call_operand.vmem [shape: f32[384,32], index: 5, kind: output, shape index: {}]
  %s6 = sld [smem:[#allocation0]]
  $region65: #{tpu_custom_call.1} parent=0
    _
  %s8 = ssub.s32 1, %s6
  %s9 = scalar_select 0, %s8, %s6
  $region1: #{tpu_custom_call.1} parent=0
    #allocation3 [shape = 'u8[131072]{0}', space=vmem, size = 0x20000, scoped, tag = 'input window, operand 0']
    #allocation4 [shape = 's32[2]{0}', space=sflag, size = 0x8, scoped, tag = 'scoped memory for tpu_custom_call.1']
    %10 = vsyncpa [#allocation4], 0
    %s11 = scalar_lea.sflag [#allocation4], 1
    %12 = vsyncpa %s11, 0
    loop: start=0, step=1, limit=11
    $region2: #{tpu_custom_call.1} parent=1 // loop_pre_header
      _
    $region3: #{tpu_custom_call.1} parent=1 // loop_header
      %s14 = sphi 0, %s18
      %p15 = scmp.ge.s32.totalorder %s14, 11
      %s21 = sphi 0, %s33
      %s22 = sphi 0, %s29
      %s23 = sphi 0, %s21
      %s24 = sphi 0, %s22
      %s25 = sphi 0, %s23
      %s26 = sphi 0, %s24
      %s38 = sphi 0, %s40
      %s41 = sphi 0, %s38
      %s42 = sphi 0, %s41
      %s58 = sphi 0, %s42
      %s64 = sphi 0, %s66
      %s67 = sphi 0, %s64
      %s68 = sphi 0, %s67
      %s84 = sphi 0, %s68
      %s90 = sphi 0, %s92
      %s93 = sphi 0, %s90
      %s94 = sphi 0, %s93
      %s110 = sphi 0, %s94
      %s114 = sphi 0, %s114
      %s116 = sphi 0, %s114
      %s117 = sphi 0, %s116
      %s131 = sphi 0, %s117
      %s135 = sphi 0, %s135
      %s137 = sphi 0, %s135
      %s138 = sphi 0, %s137
      %s152 = sphi 0, %s138
      %s158 = sphi 0, %s160
      %s161 = sphi 0, %s158
      %s162 = sphi 0, %s161
      %s178 = sphi 0, %s162
    $region4: #{tpu_custom_call.1} parent=1 // loop_header_branch
      %17 = sbr.rel (%p15) target = $region8
    $region5: #{tpu_custom_call.1} parent=1 // loop_body
      %s19 = ssub.s32 %s14, 1
      %s20 = ssub.s32 %s14, 2
      %s27 = sadd.s32 1, %s22
      %p28 = scmp.ge.s32.totalorder %s27, 3
      %s29 = scalar_select %p28, 0, %s27
      %s30 = sadd.s32 1, %s21
      %s31 = scalar_select %p28, %s30, %s21
      %p32 = scmp.ge.s32.totalorder %s31, 3
      %s33 = scalar_select %p32, 0, %s31
      %s34 = ssub.s32 %s21, %s33
      %s35 = ssub.s32 %s22, %s29
      %s36 = sor.u32 %s34, %s35
      %p37 = scmp.eq.s32.totalorder %s36, 0
      %s39 = sadd.s32 %s38, 1
      %s40 = scalar_select %p37, %s38, %s39
      %p43 = pneg %p37
      %p44 = scmp.eq.s32.totalorder %s14, 8
      %p45 = por %p43, %p44
      %p46 = scmp.ne.s32.totalorder %s38, %s41
      %p47 = scmp.eq.s32.totalorder %s14, 0
      %p48 = por %p46, %p47
      %p49 = scmp.ne.s32.totalorder %s38, %s41
      %p50 = scmp.eq.s32.totalorder %s19, 8
      %p51 = por %p49, %p50
      %p52 = scmp.ne.s32.totalorder %s41, %s42
      %p53 = scmp.eq.s32.totalorder %s19, 0
      %p54 = por %p52, %p53
      %p55 = scmp.ne.s32.totalorder %s41, %s42
      %p56 = scmp.eq.s32.totalorder %s20, 8
      %p57 = por %p55, %p56
      %p59 = scmp.ne.s32.totalorder %s42, %s58
      %p60 = scmp.eq.s32.totalorder %s20, 0
      %p61 = por %p59, %p60
      %s62 = ssub.s32 %s22, %s29
      %p63 = scmp.eq.s32.totalorder %s62, 0
      %s65 = sadd.s32 %s64, 1
      %s66 = scalar_select %p63, %s64, %s65
      %p69 = pneg %p63
      %p70 = scmp.eq.s32.totalorder %s14, 8
      %p71 = por %p69, %p70
      %p72 = scmp.ne.s32.totalorder %s64, %s67
      %p73 = scmp.eq.s32.totalorder %s14, 0
      %p74 = por %p72, %p73
      %p75 = scmp.ne.s32.totalorder %s64, %s67
      %p76 = scmp.eq.s32.totalorder %s19, 8
      %p77 = por %p75, %p76
      %p78 = scmp.ne.s32.totalorder %s67, %s68
      %p79 = scmp.eq.s32.totalorder %s19, 0
      %p80 = por %p78, %p79
      %p81 = scmp.ne.s32.totalorder %s67, %s68
      %p82 = scmp.eq.s32.totalorder %s20, 8
      %p83 = por %p81, %p82
      %p85 = scmp.ne.s32.totalorder %s68, %s84
      %p86 = scmp.eq.s32.totalorder %s20, 0
      %p87 = por %p85, %p86
      %s88 = ssub.s32 %s21, %s33
      %p89 = scmp.eq.s32.totalorder %s88, 0
      %s91 = sadd.s32 %s90, 1
      %s92 = scalar_select %p89, %s90, %s91
      %p95 = pneg %p89
      %p96 = scmp.eq.s32.totalorder %s14, 8
      %p97 = por %p95, %p96
      %p98 = scmp.ne.s32.totalorder %s90, %s93
      %p99 = scmp.eq.s32.totalorder %s14, 0
      %p100 = por %p98, %p99
      %p101 = scmp.ne.s32.totalorder %s90, %s93
      %p102 = scmp.eq.s32.totalorder %s19, 8
      %p103 = por %p101, %p102
      %p104 = scmp.ne.s32.totalorder %s93, %s94
      %p105 = scmp.eq.s32.totalorder %s19, 0
      %p106 = por %p104, %p105
      %p107 = scmp.ne.s32.totalorder %s93, %s94
      %p108 = scmp.eq.s32.totalorder %s20, 8
      %p109 = por %p107, %p108
      %p111 = scmp.ne.s32.totalorder %s94, %s110
      %p112 = scmp.eq.s32.totalorder %s20, 0
      %p113 = por %p111, %p112
      %s115 = sadd.s32 %s114, 1
      %p118 = scmp.eq.s32.totalorder %s14, 8
      %p119 = scmp.ne.s32.totalorder %s114, %s116
      %p120 = scmp.eq.s32.totalorder %s14, 0
      %p121 = por %p119, %p120
      %p122 = scmp.ne.s32.totalorder %s114, %s116
      %p123 = scmp.eq.s32.totalorder %s19, 8
      %p124 = por %p122, %p123
      %p125 = scmp.ne.s32.totalorder %s116, %s117
      %p126 = scmp.eq.s32.totalorder %s19, 0
      %p127 = por %p125, %p126
      %p128 = scmp.ne.s32.totalorder %s116, %s117
      %p129 = scmp.eq.s32.totalorder %s20, 8
      %p130 = por %p128, %p129
      %p132 = scmp.ne.s32.totalorder %s117, %s131
      %p133 = scmp.eq.s32.totalorder %s20, 0
      %p134 = por %p132, %p133
      %s136 = sadd.s32 %s135, 1
      %p139 = scmp.eq.s32.totalorder %s14, 8
      %p140 = scmp.ne.s32.totalorder %s135, %s137
      %p141 = scmp.eq.s32.totalorder %s14, 0
      %p142 = por %p140, %p141
      %p143 = scmp.ne.s32.totalorder %s135, %s137
      %p144 = scmp.eq.s32.totalorder %s19, 8
      %p145 = por %p143, %p144
      %p146 = scmp.ne.s32.totalorder %s137, %s138
      %p147 = scmp.eq.s32.totalorder %s19, 0
      %p148 = por %p146, %p147
      %p149 = scmp.ne.s32.totalorder %s137, %s138
      %p150 = scmp.eq.s32.totalorder %s20, 8
      %p151 = por %p149, %p150
      %p153 = scmp.ne.s32.totalorder %s138, %s152
      %p154 = scmp.eq.s32.totalorder %s20, 0
      %p155 = por %p153, %p154
      %s156 = ssub.s32 %s21, %s33
      %p157 = scmp.eq.s32.totalorder %s156, 0
      %s159 = sadd.s32 %s158, 1
      %s160 = scalar_select %p157, %s158, %s159
      %p163 = pneg %p157
      %p164 = scmp.eq.s32.totalorder %s14, 8
      %p165 = por %p163, %p164
      %p166 = scmp.ne.s32.totalorder %s158, %s161
      %p167 = scmp.eq.s32.totalorder %s14, 0
      %p168 = por %p166, %p167
      %p169 = scmp.ne.s32.totalorder %s158, %s161
      %p170 = scmp.eq.s32.totalorder %s19, 8
      %p171 = por %p169, %p170
      %p172 = scmp.ne.s32.totalorder %s161, %s162
      %p173 = scmp.eq.s32.totalorder %s19, 0
      %p174 = por %p172, %p173
      %p175 = scmp.ne.s32.totalorder %s161, %s162
      %p176 = scmp.eq.s32.totalorder %s20, 8
      %p177 = por %p175, %p176
      %p179 = scmp.ne.s32.totalorder %s162, %s178
      %p180 = scmp.eq.s32.totalorder %s20, 0
      %p181 = por %p179, %p180
      %p182 = scmp.le.s32.totalorder 1, %s14
      %p183 = scmp.lt.s32.totalorder %s14, 10
      %p184 = pnand %p182, %p183
      %p185 = pneg %p184
      // Predicated region
      $region9: #{tpu_custom_call.1} parent=5 // pred_check
        _
      $region10: #{tpu_custom_call.1} parent=5 // pred_check_branch
        %187 = sbr.rel (%p184) target = $region12
      $region11: #{tpu_custom_call.1} parent=5 // pred_region
        %s188 = ssub.s32 %s14, 1
        // Predicated region
        $region13: #{tpu_custom_call.1} parent=11 // pred_check
          %p189 = pneg %p127
        $region14: #{tpu_custom_call.1} parent=11 // pred_check_branch
          %191 = sbr.rel (%p189) target = $region16
        $region15: #{tpu_custom_call.1} parent=11 // pred_region
          _
        $region16: #{tpu_custom_call.1} parent=11 // pred_fallthru
          _
        // Predicated region
        $region17: #{tpu_custom_call.1} parent=11 // pred_check
          %p192 = pneg %p148
        $region18: #{tpu_custom_call.1} parent=11 // pred_check_branch
          %194 = sbr.rel (%p192) target = $region20
        $region19: #{tpu_custom_call.1} parent=11 // pred_region
          _
        $region20: #{tpu_custom_call.1} parent=11 // pred_fallthru
          _
      $region12: #{tpu_custom_call.1} parent=5 // pred_fallthru
        _
      %p195 = scmp.lt.s32.totalorder %s14, 9
      // Predicated region
      $region21: #{tpu_custom_call.1} parent=5 // pred_check
        %p196 = pneg %p195
      $region22: #{tpu_custom_call.1} parent=5 // pred_check_branch
        %198 = sbr.rel (%p196) target = $region24
      $region23: #{tpu_custom_call.1} parent=5 // pred_region
        // Predicated region
        $region25: #{tpu_custom_call.1} parent=23 // pred_check
          %p199 = pneg %p48
        $region26: #{tpu_custom_call.1} parent=23 // pred_check_branch
          %201 = sbr.rel (%p199) target = $region28
        $region27: #{tpu_custom_call.1} parent=23 // pred_region
          %s202 = sand.u32 %s38, 1
          %s203 = scalar_lea.sflag [#allocation4], %s202
          %s204 = sand.u32 %s38, 1
          %s205 = smul.addr %s204, 128
          %s206 = scalar_lea.vmem [#allocation3], %s205
          %s207 = smul.u32 16, %s21
          %s209 = ssub.s32 2048, 2048
          %210 = vsyncadd %s203, %s209
          %s211 = smul.addr %s207, 3
          %s212 = sadd.s32 %s22, %s211
          %s213 = smul.addr %s212, 128
          %s214 = scalar_lea.hbm %s0, %s213
          %s215 = sshll.u32 %s206, 4
          %s216 = int_to_ptr.vmem [resolvable:$true] %s215
          %221 = dma.hbm_to_vmem [thread:$0]  %s214, 2048, %s216, %s203, 384, 128, 8
        $region28: #{tpu_custom_call.1} parent=23 // pred_fallthru
          _
        // Predicated region
        $region29: #{tpu_custom_call.1} parent=23 // pred_check
          %p222 = pneg %p74
        $region30: #{tpu_custom_call.1} parent=23 // pred_check_branch
          %224 = sbr.rel (%p222) target = $region32
        $region31: #{tpu_custom_call.1} parent=23 // pred_region
          %s225 = smul.u32 16, %s22
          %p226 = scmp.lt.s32.totalorder %s225, 47
          %s227 = scalar_select %p226, %s225, 47
          %s228 = smul.addr %s227, 8
          %s229 = scalar_lea.vmem %s1, %s228
          %s230 = smul.u32 16, %s22
        $region32: #{tpu_custom_call.1} parent=23 // pred_fallthru
          _
        // Predicated region
        $region33: #{tpu_custom_call.1} parent=23 // pred_check
          %p231 = pneg %p100
        $region34: #{tpu_custom_call.1} parent=23 // pred_check_branch
          %233 = sbr.rel (%p231) target = $region36
        $region35: #{tpu_custom_call.1} parent=23 // pred_region
          %s234 = smul.u32 16, %s21
          %p235 = scmp.lt.s32.totalorder %s234, 47
          %s236 = scalar_select %p235, %s234, 47
          %s237 = smul.addr %s236, 8
          %s238 = scalar_lea.vmem %s2, %s237
          %s239 = smul.u32 16, %s21
        $region36: #{tpu_custom_call.1} parent=23 // pred_fallthru
          _
      $region24: #{tpu_custom_call.1} parent=5 // pred_fallthru
        _
      %p240 = scmp.le.s32.totalorder 1, %s14
      %p241 = scmp.lt.s32.totalorder %s14, 10
      %p242 = pnand %p240, %p241
      %p243 = pneg %p242
      // Predicated region
      $region37: #{tpu_custom_call.1} parent=5 // pred_check
        _
      $region38: #{tpu_custom_call.1} parent=5 // pred_check_branch
        %245 = sbr.rel (%p242) target = $region40
      $region39: #{tpu_custom_call.1} parent=5 // pred_region
        %s246 = ssub.s32 %s14, 1
        %s247 = sand.u32 %s41, 1
        %s248 = scalar_lea.sflag [#allocation4], %s247
        %s249 = sand.u32 %s41, 1
        %s250 = smul.addr %s249, 128
        %s251 = scalar_lea.vmem [#allocation3], %s250
        // Predicated region
        $region41: #{tpu_custom_call.1} parent=39 // pred_check
          %p252 = pneg %p54
        $region42: #{tpu_custom_call.1} parent=39 // pred_check_branch
          %254 = sbr.rel (%p252) target = $region44
        $region43: #{tpu_custom_call.1} parent=39 // pred_region
          %255 = dma.done %s248, 2048
        $region44: #{tpu_custom_call.1} parent=39 // pred_fallthru
          _
        %s256 = sand.u32 %s41, 1
        %s257 = scalar_lea.sflag [#allocation4], %s256
        %s258 = sand.u32 %s41, 1
        %s259 = smul.addr %s258, 128
        %s260 = scalar_lea.vmem [#allocation3], %s259
        %p261 = pneg %p54
        %p262 = pneg %p51
        %s263 = smul.u32 16, %s24
        %p264 = scmp.lt.s32.totalorder %s263, 47
        %s265 = scalar_select %p264, %s263, 47
        %s266 = smul.addr %s265, 8
        %s267 = scalar_lea.vmem %s1, %s266
        %p268 = pneg %p80
        %p269 = pneg %p77
        %s270 = smul.u32 16, %s23
        %p271 = scmp.lt.s32.totalorder %s270, 47
        %s272 = scalar_select %p271, %s270, 47
        %s273 = smul.addr %s272, 8
        %s274 = scalar_lea.vmem %s2, %s273
        %p275 = pneg %p106
        %p276 = pneg %p103
        %p277 = pneg %p127
        %p278 = pneg %p124
        %p279 = pneg %p148
        %p280 = pneg %p145
        %p281 = pneg %p174
        %p282 = pneg %p171
        %s283 = smul.u32 16, %s23
        %p284 = scmp.lt.s32.totalorder %s283, 47
        %s285 = scalar_select %p284, %s283, 47
        %s286 = smul.addr %s285, 8
        %s287 = scalar_lea.vmem %s5, %s286
        %s288 = smul.u32 16, %s23
        %s289 = smul.u32 16, %s24
        %p290 = scmp.lt.s32.totalorder %s289, 47
        %s291 = scalar_select %p290, %s289, 47
        %s292 = smul.addr %s291, 8
        %s293 = scalar_lea.vmem %s1, %s292
        %s294 = smul.u32 16, %s24
        %s295 = smul.u32 16, %s23
        %p296 = scmp.lt.s32.totalorder %s295, 47
        %s297 = scalar_select %p296, %s295, 47
        %s298 = smul.addr %s297, 8
        %s299 = scalar_lea.vmem %s2, %s298
        %s300 = smul.u32 16, %s23
        %s301 = smul.u32 16, %s23
        %p302 = scmp.lt.s32.totalorder %s301, 47
        %s303 = scalar_select %p302, %s301, 47
        %s304 = smul.addr %s303, 8
        %s305 = scalar_lea.vmem %s5, %s304
        %s306 = smul.u32 16, %s23
        %p307 = scmp.eq.s32.totalorder %s24, 0
        // Predicated region
        $region45: #{tpu_custom_call.1} parent=39 // pred_check
          %p308 = pneg %p307
        $region46: #{tpu_custom_call.1} parent=39 // pred_check_branch
          %310 = sbr.rel (%p308) target = $region48
        $region47: #{tpu_custom_call.1} parent=39 // pred_region
          %vm311 = vcmask 261120
          %312 = vst.msk [vmem:[#allocation2] sm:$0xff] %vm311, 0.0
          %313 = vst.msk [vmem:[#allocation2 + $0x8] sm:$0xff] %vm311, 0.0
          %314 = vst.msk [vmem:[#allocation2 + $0x10] sm:$0xff] %vm311, 0.0
          %315 = vst.msk [vmem:[#allocation2 + $0x18] sm:$0xff] %vm311, 0.0
          %316 = vst.msk [vmem:[#allocation2 + $0x20] sm:$0xff] %vm311, 0.0
          %317 = vst.msk [vmem:[#allocation2 + $0x28] sm:$0xff] %vm311, 0.0
          %318 = vst.msk [vmem:[#allocation2 + $0x30] sm:$0xff] %vm311, 0.0
          %319 = vst.msk [vmem:[#allocation2 + $0x38] sm:$0xff] %vm311, 0.0
          %320 = vst.msk [vmem:[#allocation2 + $0x40] sm:$0xff] %vm311, 0.0
          %321 = vst.msk [vmem:[#allocation2 + $0x48] sm:$0xff] %vm311, 0.0
          %322 = vst.msk [vmem:[#allocation2 + $0x50] sm:$0xff] %vm311, 0.0
          %323 = vst.msk [vmem:[#allocation2 + $0x58] sm:$0xff] %vm311, 0.0
          %324 = vst.msk [vmem:[#allocation2 + $0x60] sm:$0xff] %vm311, 0.0
          %325 = vst.msk [vmem:[#allocation2 + $0x68] sm:$0xff] %vm311, 0.0
          %326 = vst.msk [vmem:[#allocation2 + $0x70] sm:$0xff] %vm311, 0.0
          %327 = vst.msk [vmem:[#allocation2 + $0x78] sm:$0xff] %vm311, 0.0
        $region48: #{tpu_custom_call.1} parent=39 // pred_fallthru
          _
        %v328 = vld [vmem:[#allocation2] sm:$0xff]
        %v329 = vld [vmem:[#allocation2 + $0x8] sm:$0xff]
        %v330 = vld [vmem:[#allocation2 + $0x10] sm:$0xff]
        %v331 = vld [vmem:[#allocation2 + $0x18] sm:$0xff]
        %v332 = vld [vmem:[#allocation2 + $0x20] sm:$0xff]
        %v333 = vld [vmem:[#allocation2 + $0x28] sm:$0xff]
        %v334 = vld [vmem:[#allocation2 + $0x30] sm:$0xff]
        %v335 = vld [vmem:[#allocation2 + $0x38] sm:$0xff]
        %v336 = vld [vmem:[#allocation2 + $0x40] sm:$0xff]
        %v337 = vld [vmem:[#allocation2 + $0x48] sm:$0xff]
        %v338 = vld [vmem:[#allocation2 + $0x50] sm:$0xff]
        %v339 = vld [vmem:[#allocation2 + $0x58] sm:$0xff]
        %v340 = vld [vmem:[#allocation2 + $0x60] sm:$0xff]
        %v341 = vld [vmem:[#allocation2 + $0x68] sm:$0xff]
        %v342 = vld [vmem:[#allocation2 + $0x70] sm:$0xff]
        %v343 = vld [vmem:[#allocation2 + $0x78] sm:$0xff]
        %v344 = vld [vmem:[%s251] sm:$0xff]
        %v345 = vld [vmem:[%s251 + $0x8] sm:$0xff]
        %v346 = vld [vmem:[%s251 + $0x10] sm:$0xff]
        %v347 = vld [vmem:[%s251 + $0x18] sm:$0xff]
        %v348 = vld [vmem:[%s251 + $0x20] sm:$0xff]
        %v349 = vld [vmem:[%s251 + $0x28] sm:$0xff]
        %v350 = vld [vmem:[%s251 + $0x30] sm:$0xff]
        %v351 = vld [vmem:[%s251 + $0x38] sm:$0xff]
        %v352 = vld [vmem:[%s251 + $0x40] sm:$0xff]
        %v353 = vld [vmem:[%s251 + $0x48] sm:$0xff]
        %v354 = vld [vmem:[%s251 + $0x50] sm:$0xff]
        %v355 = vld [vmem:[%s251 + $0x58] sm:$0xff]
        %v356 = vld [vmem:[%s251 + $0x60] sm:$0xff]
        %v357 = vld [vmem:[%s251 + $0x68] sm:$0xff]
        %v358 = vld [vmem:[%s251 + $0x70] sm:$0xff]
        %v359 = vld [vmem:[%s251 + $0x78] sm:$0xff]
        %v360 = vld [vmem:[%s293] sm:$0xff]
        %v361 = vld [vmem:[%s293 + $0x8] sm:$0xff]
        %v362 = vld [vmem:[%s293 + $0x10] sm:$0xff]
        %v363 = vld [vmem:[%s293 + $0x18] sm:$0xff]
        %v364 = vld [vmem:[%s293 + $0x20] sm:$0xff]
        %v365 = vld [vmem:[%s293 + $0x28] sm:$0xff]
        %v366 = vld [vmem:[%s293 + $0x30] sm:$0xff]
        %v367 = vld [vmem:[%s293 + $0x38] sm:$0xff]
        %v368 = vld [vmem:[%s293 + $0x40] sm:$0xff]
        %v369 = vld [vmem:[%s293 + $0x48] sm:$0xff]
        %v370 = vld [vmem:[%s293 + $0x50] sm:$0xff]
        %v371 = vld [vmem:[%s293 + $0x58] sm:$0xff]
        %v372 = vld [vmem:[%s293 + $0x60] sm:$0xff]
        %v373 = vld [vmem:[%s293 + $0x68] sm:$0xff]
        %v374 = vld [vmem:[%s293 + $0x70] sm:$0xff]
        %v375 = vld [vmem:[%s293 + $0x78] sm:$0xff]
        %376 = vmatprep.subr.mxu0 0.0
        %377 = vmatpush1.msra.mxu0 %v375
        %378 = vmatprep.subr.mxu0 0.0
        %379 = vmatpush1.msra.mxu0 %v374
        %380 = vmatprep.subr.mxu0 0.0
        %381 = vmatpush1.msra.mxu0 %v373
        %382 = vmatprep.subr.mxu0 0.0
        %383 = vmatpush1.msra.mxu0 %v372
        %384 = vmatprep.subr.mxu0 0.0
        %385 = vmatpush1.msra.mxu0 %v371
        %386 = vmatprep.subr.mxu0 0.0
        %387 = vmatpush1.msra.mxu0 %v370
        %388 = vmatprep.subr.mxu0 0.0
        %389 = vmatpush1.msra.mxu0 %v369
        %390 = vmatprep.subr.mxu0 0.0
        %391 = vmatpush1.msra.mxu0 %v368
        %392 = vmatprep.subr.mxu0 0.0
        %393 = vmatpush1.msra.mxu0 %v367
        %394 = vmatprep.subr.mxu0 0.0
        %395 = vmatpush1.msra.mxu0 %v366
        %396 = vmatprep.subr.mxu0 0.0
        %397 = vmatpush1.msra.mxu0 %v365
        %398 = vmatprep.subr.mxu0 0.0
        %399 = vmatpush1.msra.mxu0 %v364
        %400 = vmatprep.subr.mxu0 0.0
        %401 = vmatpush1.msra.mxu0 %v363
        %402 = vmatprep.subr.mxu0 0.0
        %403 = vmatpush1.msra.mxu0 %v362
        %404 = vmatprep.subr.mxu0 0.0
        %405 = vmatpush1.msra.mxu0 %v361
        %406 = vmatprep.subr.mxu0 0.0
        %407 = vmatpush1.msra.mxu0 %v360
        %408 = vmatprep.subr.mxu0 0.0
        %409 = vmatpush2.msra.mxu0 0.0
        %410 = vmatprep.subr.mxu0 0.0
        %411 = vmatpush2.msra.mxu0 0.0
        %412 = vmatprep.subr.mxu0 0.0
        %413 = vmatpush2.msra.mxu0 0.0
        %414 = vmatprep.subr.mxu0 0.0
        %415 = vmatpush2.msra.mxu0 0.0
        %416 = vmatprep.subr.mxu0 0.0
        %417 = vmatpush2.msra.mxu0 0.0
        %418 = vmatprep.subr.mxu0 0.0
        %419 = vmatpush2.msra.mxu0 0.0
        %420 = vmatprep.subr.mxu0 0.0
        %421 = vmatpush2.msra.mxu0 0.0
        %422 = vmatprep.subr.mxu0 0.0
        %423 = vmatpush2.msra.mxu0 0.0
        %424 = vmatprep.subr.mxu0 0.0
        %425 = vmatpush2.msra.mxu0 0.0
        %426 = vmatprep.subr.mxu0 0.0
        %427 = vmatpush2.msra.mxu0 0.0
        %428 = vmatprep.subr.mxu0 0.0
        %429 = vmatpush2.msra.mxu0 0.0
        %430 = vmatprep.subr.mxu0 0.0
        %431 = vmatpush2.msra.mxu0 0.0
        %432 = vmatprep.subr.mxu0 0.0
        %433 = vmatpush2.msra.mxu0 0.0
        %434 = vmatprep.subr.mxu0 0.0
        %435 = vmatpush2.msra.mxu0 0.0
        %436 = vmatprep.subr.mxu0 0.0
        %437 = vmatpush2.msra.mxu0 0.0
        %438 = vmatprep.subr.mxu0 0.0
        %439 = vmatpush2.msra.mxu0 0.0
        %440 = vmatprep.mubr.f32.mxu0 0.0
        %441 = vmatmul.mubr.f32.gmra.mxu0 %v344
        %v442 = vpop.f32.mrf.mxu0
        %v443 = vadd.f32 0.0, %v442
        %v444 = vpop.f32.mrf.mxu0
        %445 = vmatprep.mubr.f32.mxu0 0.0
        %446 = vmatmul.mubr.f32.gmra.mxu0 %v345
        %v447 = vpop.f32.mrf.mxu0
        %v448 = vadd.f32 0.0, %v447
        %v449 = vpop.f32.mrf.mxu0
        %450 = vmatprep.mubr.f32.mxu0 0.0
        %451 = vmatmul.mubr.f32.gmra.mxu0 %v346
        %v452 = vpop.f32.mrf.mxu0
        %v453 = vadd.f32 0.0, %v452
        %v454 = vpop.f32.mrf.mxu0
        %455 = vmatprep.mubr.f32.mxu0 0.0
        %456 = vmatmul.mubr.f32.gmra.mxu0 %v347
        %v457 = vpop.f32.mrf.mxu0
        %v458 = vadd.f32 0.0, %v457
        %v459 = vpop.f32.mrf.mxu0
        %460 = vmatprep.mubr.f32.mxu0 0.0
        %461 = vmatmul.mubr.f32.gmra.mxu0 %v348
        %v462 = vpop.f32.mrf.mxu0
        %v463 = vadd.f32 0.0, %v462
        %v464 = vpop.f32.mrf.mxu0
        %465 = vmatprep.mubr.f32.mxu0 0.0
        %466 = vmatmul.mubr.f32.gmra.mxu0 %v349
        %v467 = vpop.f32.mrf.mxu0
        %v468 = vadd.f32 0.0, %v467
        %v469 = vpop.f32.mrf.mxu0
        %470 = vmatprep.mubr.f32.mxu0 0.0
        %471 = vmatmul.mubr.f32.gmra.mxu0 %v350
        %v472 = vpop.f32.mrf.mxu0
        %v473 = vadd.f32 0.0, %v472
        %v474 = vpop.f32.mrf.mxu0
        %475 = vmatprep.mubr.f32.mxu0 0.0
        %476 = vmatmul.mubr.f32.gmra.mxu0 %v351
        %v477 = vpop.f32.mrf.mxu0
        %v478 = vadd.f32 0.0, %v477
        %v479 = vpop.f32.mrf.mxu0
        %480 = vmatprep.mubr.f32.mxu0 0.0
        %481 = vmatmul.mubr.f32.gmra.mxu0 %v352
        %v482 = vpop.f32.mrf.mxu0
        %v483 = vadd.f32 0.0, %v482
        %v484 = vpop.f32.mrf.mxu0
        %485 = vmatprep.mubr.f32.mxu0 0.0
        %486 = vmatmul.mubr.f32.gmra.mxu0 %v353
        %v487 = vpop.f32.mrf.mxu0
        %v488 = vadd.f32 0.0, %v487
        %v489 = vpop.f32.mrf.mxu0
        %490 = vmatprep.mubr.f32.mxu0 0.0
        %491 = vmatmul.mubr.f32.gmra.mxu0 %v354
        %v492 = vpop.f32.mrf.mxu0
        %v493 = vadd.f32 0.0, %v492
        %v494 = vpop.f32.mrf.mxu0
        %495 = vmatprep.mubr.f32.mxu0 0.0
        %496 = vmatmul.mubr.f32.gmra.mxu0 %v355
        %v497 = vpop.f32.mrf.mxu0
        %v498 = vadd.f32 0.0, %v497
        %v499 = vpop.f32.mrf.mxu0
        %500 = vmatprep.mubr.f32.mxu0 0.0
        %501 = vmatmul.mubr.f32.gmra.mxu0 %v356
        %v502 = vpop.f32.mrf.mxu0
        %v503 = vadd.f32 0.0, %v502
        %v504 = vpop.f32.mrf.mxu0
        %505 = vmatprep.mubr.f32.mxu0 0.0
        %506 = vmatmul.mubr.f32.gmra.mxu0 %v357
        %v507 = vpop.f32.mrf.mxu0
        %v508 = vadd.f32 0.0, %v507
        %v509 = vpop.f32.mrf.mxu0
        %510 = vmatprep.mubr.f32.mxu0 0.0
        %511 = vmatmul.mubr.f32.gmra.mxu0 %v358
        %v512 = vpop.f32.mrf.mxu0
        %v513 = vadd.f32 0.0, %v512
        %v514 = vpop.f32.mrf.mxu0
        %515 = vmatprep.mubr.f32.mxu0 0.0
        %516 = vmatmul.mubr.f32.gmra.mxu0 %v359
        %v517 = vpop.f32.mrf.mxu0
        %v518 = vadd.f32 0.0, %v517
        %v519 = vpop.f32.mrf.mxu0
        %520 = vdwg.mxu0
        %v521 = vadd.f32 %v328, %v443
        %v522 = vadd.f32 %v329, %v448
        %v523 = vadd.f32 %v330, %v453
        %v524 = vadd.f32 %v331, %v458
        %v525 = vadd.f32 %v332, %v463
        %v526 = vadd.f32 %v333, %v468
        %v527 = vadd.f32 %v334, %v473
        %v528 = vadd.f32 %v335, %v478
        %v529 = vadd.f32 %v336, %v483
        %v530 = vadd.f32 %v337, %v488
        %v531 = vadd.f32 %v338, %v493
        %v532 = vadd.f32 %v339, %v498
        %v533 = vadd.f32 %v340, %v503
        %v534 = vadd.f32 %v341, %v508
        %v535 = vadd.f32 %v342, %v513
        %v536 = vadd.f32 %v343, %v518
        %vm537 = vcmask 261120
        %538 = vst.msk [vmem:[#allocation2] sm:$0xff] %vm537, %v521
        %539 = vst.msk [vmem:[#allocation2 + $0x8] sm:$0xff] %vm537, %v522
        %540 = vst.msk [vmem:[#allocation2 + $0x10] sm:$0xff] %vm537, %v523
        %541 = vst.msk [vmem:[#allocation2 + $0x18] sm:$0xff] %vm537, %v524
        %542 = vst.msk [vmem:[#allocation2 + $0x20] sm:$0xff] %vm537, %v525
        %543 = vst.msk [vmem:[#allocation2 + $0x28] sm:$0xff] %vm537, %v526
        %544 = vst.msk [vmem:[#allocation2 + $0x30] sm:$0xff] %vm537, %v527
        %545 = vst.msk [vmem:[#allocation2 + $0x38] sm:$0xff] %vm537, %v528
        %546 = vst.msk [vmem:[#allocation2 + $0x40] sm:$0xff] %vm537, %v529
        %547 = vst.msk [vmem:[#allocation2 + $0x48] sm:$0xff] %vm537, %v530
        %548 = vst.msk [vmem:[#allocation2 + $0x50] sm:$0xff] %vm537, %v531
        %549 = vst.msk [vmem:[#allocation2 + $0x58] sm:$0xff] %vm537, %v532
        %550 = vst.msk [vmem:[#allocation2 + $0x60] sm:$0xff] %vm537, %v533
        %551 = vst.msk [vmem:[#allocation2 + $0x68] sm:$0xff] %vm537, %v534
        %552 = vst.msk [vmem:[#allocation2 + $0x70] sm:$0xff] %vm537, %v535
        %553 = vst.msk [vmem:[#allocation2 + $0x78] sm:$0xff] %vm537, %v536
        %p554 = scmp.eq.s32.totalorder %s24, 2
        // Predicated region
        $region49: #{tpu_custom_call.1} parent=39 // pred_check
          %p555 = pneg %p554
        $region50: #{tpu_custom_call.1} parent=39 // pred_check_branch
          %557 = sbr.rel (%p555) target = $region52
        $region51: #{tpu_custom_call.1} parent=39 // pred_region
          %v558 = vld [vmem:[#allocation2] sm:$0xff]
          %v559 = vld [vmem:[#allocation2 + $0x8] sm:$0xff]
          %v560 = vld [vmem:[#allocation2 + $0x10] sm:$0xff]
          %v561 = vld [vmem:[#allocation2 + $0x18] sm:$0xff]
          %v562 = vld [vmem:[#allocation2 + $0x20] sm:$0xff]
          %v563 = vld [vmem:[#allocation2 + $0x28] sm:$0xff]
          %v564 = vld [vmem:[#allocation2 + $0x30] sm:$0xff]
          %v565 = vld [vmem:[#allocation2 + $0x38] sm:$0xff]
          %v566 = vld [vmem:[#allocation2 + $0x40] sm:$0xff]
          %v567 = vld [vmem:[#allocation2 + $0x48] sm:$0xff]
          %v568 = vld [vmem:[#allocation2 + $0x50] sm:$0xff]
          %v569 = vld [vmem:[#allocation2 + $0x58] sm:$0xff]
          %v570 = vld [vmem:[#allocation2 + $0x60] sm:$0xff]
          %v571 = vld [vmem:[#allocation2 + $0x68] sm:$0xff]
          %v572 = vld [vmem:[#allocation2 + $0x70] sm:$0xff]
          %v573 = vld [vmem:[#allocation2 + $0x78] sm:$0xff]
          %v574 = vld [vmem:[%s299] sm:$0xff]
          %v575 = vld [vmem:[%s299 + $0x8] sm:$0xff]
          %v576 = vld [vmem:[%s299 + $0x10] sm:$0xff]
          %v577 = vld [vmem:[%s299 + $0x18] sm:$0xff]
          %v578 = vld [vmem:[%s299 + $0x20] sm:$0xff]
          %v579 = vld [vmem:[%s299 + $0x28] sm:$0xff]
          %v580 = vld [vmem:[%s299 + $0x30] sm:$0xff]
          %v581 = vld [vmem:[%s299 + $0x38] sm:$0xff]
          %v582 = vld [vmem:[%s299 + $0x40] sm:$0xff]
          %v583 = vld [vmem:[%s299 + $0x48] sm:$0xff]
          %v584 = vld [vmem:[%s299 + $0x50] sm:$0xff]
          %v585 = vld [vmem:[%s299 + $0x58] sm:$0xff]
          %v586 = vld [vmem:[%s299 + $0x60] sm:$0xff]
          %v587 = vld [vmem:[%s299 + $0x68] sm:$0xff]
          %v588 = vld [vmem:[%s299 + $0x70] sm:$0xff]
          %v589 = vld [vmem:[%s299 + $0x78] sm:$0xff]
          %v590 = vadd.f32 %v574, %v558
          %v591 = vadd.f32 %v575, %v559
          %v592 = vadd.f32 %v576, %v560
          %v593 = vadd.f32 %v577, %v561
          %v594 = vadd.f32 %v578, %v562
          %v595 = vadd.f32 %v579, %v563
          %v596 = vadd.f32 %v580, %v564
          %v597 = vadd.f32 %v581, %v565
          %v598 = vadd.f32 %v582, %v566
          %v599 = vadd.f32 %v583, %v567
          %v600 = vadd.f32 %v584, %v568
          %v601 = vadd.f32 %v585, %v569
          %v602 = vadd.f32 %v586, %v570
          %v603 = vadd.f32 %v587, %v571
          %v604 = vadd.f32 %v588, %v572
          %v605 = vadd.f32 %v589, %v573
          %v606 = vmul.f32 %v574, %v558
          %v607 = vmul.f32 %v575, %v559
          %v608 = vmul.f32 %v576, %v560
          %v609 = vmul.f32 %v577, %v561
          %v610 = vmul.f32 %v578, %v562
          %v611 = vmul.f32 %v579, %v563
          %v612 = vmul.f32 %v580, %v564
          %v613 = vmul.f32 %v581, %v565
          %v614 = vmul.f32 %v582, %v566
          %v615 = vmul.f32 %v583, %v567
          %v616 = vmul.f32 %v584, %v568
          %v617 = vmul.f32 %v585, %v569
          %v618 = vmul.f32 %v586, %v570
          %v619 = vmul.f32 %v587, %v571
          %v620 = vmul.f32 %v588, %v572
          %v621 = vmul.f32 %v589, %v573
          %638 = vrot.lane.b32.xlu0 %v606, 32
          %v639 = vpop.permute.xlu0 %638
          %640 = vrot.lane.b32.xlu0 %v607, 32
          %v641 = vpop.permute.xlu0 %640
          %642 = vrot.lane.b32.xlu0 %v608, 32
          %v643 = vpop.permute.xlu0 %642
          %644 = vrot.lane.b32.xlu0 %v609, 32
          %v645 = vpop.permute.xlu0 %644
          %646 = vrot.lane.b32.xlu0 %v610, 32
          %v647 = vpop.permute.xlu0 %646
          %648 = vrot.lane.b32.xlu0 %v611, 32
          %v649 = vpop.permute.xlu0 %648
          %650 = vrot.lane.b32.xlu0 %v612, 32
          %v651 = vpop.permute.xlu0 %650
          %652 = vrot.lane.b32.xlu0 %v613, 32
          %v653 = vpop.permute.xlu0 %652
          %654 = vrot.lane.b32.xlu0 %v614, 32
          %v655 = vpop.permute.xlu0 %654
          %656 = vrot.lane.b32.xlu0 %v615, 32
          %v657 = vpop.permute.xlu0 %656
          %658 = vrot.lane.b32.xlu0 %v616, 32
          %v659 = vpop.permute.xlu0 %658
          %660 = vrot.lane.b32.xlu0 %v617, 32
          %v661 = vpop.permute.xlu0 %660
          %662 = vrot.lane.b32.xlu0 %v618, 32
          %v663 = vpop.permute.xlu0 %662
          %664 = vrot.lane.b32.xlu0 %v619, 32
          %v665 = vpop.permute.xlu0 %664
          %666 = vrot.lane.b32.xlu0 %v620, 32
          %v667 = vpop.permute.xlu0 %666
          %668 = vrot.lane.b32.xlu0 %v621, 32
          %v669 = vpop.permute.xlu0 %668
          %v686 = vsel %vm537, %v590, %v639
          %v687 = vsel %vm537, %v591, %v641
          %v688 = vsel %vm537, %v592, %v643
          %v689 = vsel %vm537, %v593, %v645
          %v690 = vsel %vm537, %v594, %v647
          %v691 = vsel %vm537, %v595, %v649
          %v692 = vsel %vm537, %v596, %v651
          %v693 = vsel %vm537, %v597, %v653
          %v694 = vsel %vm537, %v598, %v655
          %v695 = vsel %vm537, %v599, %v657
          %v696 = vsel %vm537, %v600, %v659
          %v697 = vsel %vm537, %v601, %v661
          %v698 = vsel %vm537, %v602, %v663
          %v699 = vsel %vm537, %v603, %v665
          %v700 = vsel %vm537, %v604, %v667
          %v701 = vsel %vm537, %v605, %v669
          %v702 = vld [vmem:[%s3] sm:$0xff]
          %v703 = vld [vmem:[%s3 + $0x8] sm:$0xff]
          %v704 = vld [vmem:[%s3 + $0x10] sm:$0xff]
          %v705 = vld [vmem:[%s3 + $0x18] sm:$0xff]
          %v706 = vld [vmem:[%s3 + $0x20] sm:$0xff]
          %v707 = vld [vmem:[%s3 + $0x28] sm:$0xff]
          %v708 = vld [vmem:[%s3 + $0x30] sm:$0xff]
          %v709 = vld [vmem:[%s3 + $0x38] sm:$0xff]
          %v710 = vld [vmem:[%s4] sm:$0x1]
          %v712 = vlaneseq
          %v713 = vshrl.u32 %v712, 7
          %v714 = vsub.s32 0, %v713
          %v715 = vrot.slane %v710, %v714
          %vm717 = vcmask 523264
          %v719 = vsel %vm717, %v686, 0
          %v722 = vsel %vm717, %v687, 0
          %v725 = vsel %vm717, %v688, 0
          %v728 = vsel %vm717, %v689, 0
          %v731 = vsel %vm717, %v690, 0
          %v734 = vsel %vm717, %v691, 0
          %v737 = vsel %vm717, %v692, 0
          %v740 = vsel %vm717, %v693, 0
          %v743 = vsel %vm717, %v694, 0
          %v746 = vsel %vm717, %v695, 0
          %v749 = vsel %vm717, %v696, 0
          %v752 = vsel %vm717, %v697, 0
          %v755 = vsel %vm717, %v698, 0
          %v758 = vsel %vm717, %v699, 0
          %v761 = vsel %vm717, %v700, 0
          %v764 = vsel %vm717, %v701, 0
          %766 = vmatprep.subr.mxu0 0.0
          %767 = vmatpush1.msra.mxu0 0.0
          %768 = vmatprep.subr.mxu0 0.0
          %769 = vmatpush1.msra.mxu0 0.0
          %770 = vmatprep.subr.mxu0 0.0
          %771 = vmatpush1.msra.mxu0 0.0
          %772 = vmatprep.subr.mxu0 0.0
          %773 = vmatpush1.msra.mxu0 0.0
          %774 = vmatprep.subr.mxu0 0.0
          %775 = vmatpush1.msra.mxu0 0.0
          %776 = vmatprep.subr.mxu0 0.0
          %777 = vmatpush1.msra.mxu0 0.0
          %778 = vmatprep.subr.mxu0 0.0
          %779 = vmatpush1.msra.mxu0 0.0
          %780 = vmatprep.subr.mxu0 0.0
          %781 = vmatpush1.msra.mxu0 0.0
          %782 = vmatprep.subr.mxu0 0.0
          %783 = vmatpush1.msra.mxu0 %v709
          %784 = vmatprep.subr.mxu0 0.0
          %785 = vmatpush1.msra.mxu0 %v708
          %786 = vmatprep.subr.mxu0 0.0
          %787 = vmatpush1.msra.mxu0 %v707
          %788 = vmatprep.subr.mxu0 0.0
          %789 = vmatpush1.msra.mxu0 %v706
          %790 = vmatprep.subr.mxu0 0.0
          %791 = vmatpush1.msra.mxu0 %v705
          %792 = vmatprep.subr.mxu0 0.0
          %793 = vmatpush1.msra.mxu0 %v704
          %794 = vmatprep.subr.mxu0 0.0
          %795 = vmatpush1.msra.mxu0 %v703
          %796 = vmatprep.subr.mxu0 0.0
          %797 = vmatpush1.msra.mxu0 %v702
          %798 = vmatprep.subr.mxu0 0.0
          %799 = vmatpush2.msra.mxu0 0.0
          %800 = vmatprep.subr.mxu0 0.0
          %801 = vmatpush2.msra.mxu0 0.0
          %802 = vmatprep.subr.mxu0 0.0
          %803 = vmatpush2.msra.mxu0 0.0
          %804 = vmatprep.subr.mxu0 0.0
          %805 = vmatpush2.msra.mxu0 0.0
          %806 = vmatprep.subr.mxu0 0.0
          %807 = vmatpush2.msra.mxu0 0.0
          %808 = vmatprep.subr.mxu0 0.0
          %809 = vmatpush2.msra.mxu0 0.0
          %810 = vmatprep.subr.mxu0 0.0
          %811 = vmatpush2.msra.mxu0 0.0
          %812 = vmatprep.subr.mxu0 0.0
          %813 = vmatpush2.msra.mxu0 0.0
          %814 = vmatprep.subr.mxu0 0.0
          %815 = vmatpush2.msra.mxu0 0.0
          %816 = vmatprep.subr.mxu0 0.0
          %817 = vmatpush2.msra.mxu0 0.0
          %818 = vmatprep.subr.mxu0 0.0
          %819 = vmatpush2.msra.mxu0 0.0
          %820 = vmatprep.subr.mxu0 0.0
          %821 = vmatpush2.msra.mxu0 0.0
          %822 = vmatprep.subr.mxu0 0.0
          %823 = vmatpush2.msra.mxu0 0.0
          %824 = vmatprep.subr.mxu0 0.0
          %825 = vmatpush2.msra.mxu0 0.0
          %826 = vmatprep.subr.mxu0 0.0
          %827 = vmatpush2.msra.mxu0 0.0
          %828 = vmatprep.subr.mxu0 0.0
          %829 = vmatpush2.msra.mxu0 0.0
          %830 = vmatprep.mubr.f32.mxu0 0.0
          %831 = vmatmul.mubr.f32.gmra.mxu0 %v719
          %v832 = vpop.f32.mrf.mxu0
          %v833 = vadd.f32 %v715, %v832
          %v834 = vpop.f32.mrf.mxu0
          %835 = vmatprep.mubr.f32.mxu0 0.0
          %836 = vmatmul.mubr.f32.gmra.mxu0 %v722
          %v837 = vpop.f32.mrf.mxu0
          %v838 = vadd.f32 %v715, %v837
          %v839 = vpop.f32.mrf.mxu0
          %840 = vmatprep.mubr.f32.mxu0 0.0
          %841 = vmatmul.mubr.f32.gmra.mxu0 %v725
          %v842 = vpop.f32.mrf.mxu0
          %v843 = vadd.f32 %v715, %v842
          %v844 = vpop.f32.mrf.mxu0
          %845 = vmatprep.mubr.f32.mxu0 0.0
          %846 = vmatmul.mubr.f32.gmra.mxu0 %v728
          %v847 = vpop.f32.mrf.mxu0
          %v848 = vadd.f32 %v715, %v847
          %v849 = vpop.f32.mrf.mxu0
          %850 = vmatprep.mubr.f32.mxu0 0.0
          %851 = vmatmul.mubr.f32.gmra.mxu0 %v731
          %v852 = vpop.f32.mrf.mxu0
          %v853 = vadd.f32 %v715, %v852
          %v854 = vpop.f32.mrf.mxu0
          %855 = vmatprep.mubr.f32.mxu0 0.0
          %856 = vmatmul.mubr.f32.gmra.mxu0 %v734
          %v857 = vpop.f32.mrf.mxu0
          %v858 = vadd.f32 %v715, %v857
          %v859 = vpop.f32.mrf.mxu0
          %860 = vmatprep.mubr.f32.mxu0 0.0
          %861 = vmatmul.mubr.f32.gmra.mxu0 %v737
          %v862 = vpop.f32.mrf.mxu0
          %v863 = vadd.f32 %v715, %v862
          %v864 = vpop.f32.mrf.mxu0
          %865 = vmatprep.mubr.f32.mxu0 0.0
          %866 = vmatmul.mubr.f32.gmra.mxu0 %v740
          %v867 = vpop.f32.mrf.mxu0
          %v868 = vadd.f32 %v715, %v867
          %v869 = vpop.f32.mrf.mxu0
          %870 = vmatprep.mubr.f32.mxu0 0.0
          %871 = vmatmul.mubr.f32.gmra.mxu0 %v743
          %v872 = vpop.f32.mrf.mxu0
          %v873 = vadd.f32 %v715, %v872
          %v874 = vpop.f32.mrf.mxu0
          %875 = vmatprep.mubr.f32.mxu0 0.0
          %876 = vmatmul.mubr.f32.gmra.mxu0 %v746
          %v877 = vpop.f32.mrf.mxu0
          %v878 = vadd.f32 %v715, %v877
          %v879 = vpop.f32.mrf.mxu0
          %880 = vmatprep.mubr.f32.mxu0 0.0
          %881 = vmatmul.mubr.f32.gmra.mxu0 %v749
          %v882 = vpop.f32.mrf.mxu0
          %v883 = vadd.f32 %v715, %v882
          %v884 = vpop.f32.mrf.mxu0
          %885 = vmatprep.mubr.f32.mxu0 0.0
          %886 = vmatmul.mubr.f32.gmra.mxu0 %v752
          %v887 = vpop.f32.mrf.mxu0
          %v888 = vadd.f32 %v715, %v887
          %v889 = vpop.f32.mrf.mxu0
          %890 = vmatprep.mubr.f32.mxu0 0.0
          %891 = vmatmul.mubr.f32.gmra.mxu0 %v755
          %v892 = vpop.f32.mrf.mxu0
          %v893 = vadd.f32 %v715, %v892
          %v894 = vpop.f32.mrf.mxu0
          %895 = vmatprep.mubr.f32.mxu0 0.0
          %896 = vmatmul.mubr.f32.gmra.mxu0 %v758
          %v897 = vpop.f32.mrf.mxu0
          %v898 = vadd.f32 %v715, %v897
          %v899 = vpop.f32.mrf.mxu0
          %900 = vmatprep.mubr.f32.mxu0 0.0
          %901 = vmatmul.mubr.f32.gmra.mxu0 %v761
          %v902 = vpop.f32.mrf.mxu0
          %v903 = vadd.f32 %v715, %v902
          %v904 = vpop.f32.mrf.mxu0
          %905 = vmatprep.mubr.f32.mxu0 0.0
          %906 = vmatmul.mubr.f32.gmra.mxu0 %v764
          %v907 = vpop.f32.mrf.mxu0
          %v908 = vadd.f32 %v715, %v907
          %v909 = vpop.f32.mrf.mxu0
          %910 = vdwg.mxu0
          %vm911 = vcmp.gt.f32.partialorder %v833, 0.0
          %vm912 = vcmp.gt.f32.partialorder %v838, 0.0
          %vm913 = vcmp.gt.f32.partialorder %v843, 0.0
          %vm914 = vcmp.gt.f32.partialorder %v848, 0.0
          %vm915 = vcmp.gt.f32.partialorder %v853, 0.0
          %vm916 = vcmp.gt.f32.partialorder %v858, 0.0
          %vm917 = vcmp.gt.f32.partialorder %v863, 0.0
          %vm918 = vcmp.gt.f32.partialorder %v868, 0.0
          %vm919 = vcmp.gt.f32.partialorder %v873, 0.0
          %vm920 = vcmp.gt.f32.partialorder %v878, 0.0
          %vm921 = vcmp.gt.f32.partialorder %v883, 0.0
          %vm922 = vcmp.gt.f32.partialorder %v888, 0.0
          %vm923 = vcmp.gt.f32.partialorder %v893, 0.0
          %vm924 = vcmp.gt.f32.partialorder %v898, 0.0
          %vm925 = vcmp.gt.f32.partialorder %v903, 0.0
          %vm926 = vcmp.gt.f32.partialorder %v908, 0.0
          %v927 = vmul.f32 %v833, 0.01
          %v928 = vmul.f32 %v838, 0.01
          %v929 = vmul.f32 %v843, 0.01
          %v930 = vmul.f32 %v848, 0.01
          %v931 = vmul.f32 %v853, 0.01
          %v932 = vmul.f32 %v858, 0.01
          %v933 = vmul.f32 %v863, 0.01
          %v934 = vmul.f32 %v868, 0.01
          %v935 = vmul.f32 %v873, 0.01
          %v936 = vmul.f32 %v878, 0.01
          %v937 = vmul.f32 %v883, 0.01
          %v938 = vmul.f32 %v888, 0.01
          %v939 = vmul.f32 %v893, 0.01
          %v940 = vmul.f32 %v898, 0.01
          %v941 = vmul.f32 %v903, 0.01
          %v942 = vmul.f32 %v908, 0.01
          %v943 = vsel %vm911, %v833, %v927
          %v944 = vsel %vm912, %v838, %v928
          %v945 = vsel %vm913, %v843, %v929
          %v946 = vsel %vm914, %v848, %v930
          %v947 = vsel %vm915, %v853, %v931
          %v948 = vsel %vm916, %v858, %v932
          %v949 = vsel %vm917, %v863, %v933
          %v950 = vsel %vm918, %v868, %v934
          %v951 = vsel %vm919, %v873, %v935
          %v952 = vsel %vm920, %v878, %v936
          %v953 = vsel %vm921, %v883, %v937
          %v954 = vsel %vm922, %v888, %v938
          %v955 = vsel %vm923, %v893, %v939
          %v956 = vsel %vm924, %v898, %v940
          %v957 = vsel %vm925, %v903, %v941
          %v958 = vsel %vm926, %v908, %v942
          %975 = vrot.lane.b32.xlu0 %v943, 96
          %v976 = vpop.permute.xlu0 %975
          %977 = vrot.lane.b32.xlu0 %v944, 96
          %v978 = vpop.permute.xlu0 %977
          %979 = vrot.lane.b32.xlu0 %v945, 96
          %v980 = vpop.permute.xlu0 %979
          %981 = vrot.lane.b32.xlu0 %v946, 96
          %v982 = vpop.permute.xlu0 %981
          %983 = vrot.lane.b32.xlu0 %v947, 96
          %v984 = vpop.permute.xlu0 %983
          %985 = vrot.lane.b32.xlu0 %v948, 96
          %v986 = vpop.permute.xlu0 %985
          %987 = vrot.lane.b32.xlu0 %v949, 96
          %v988 = vpop.permute.xlu0 %987
          %989 = vrot.lane.b32.xlu0 %v950, 96
          %v990 = vpop.permute.xlu0 %989
          %991 = vrot.lane.b32.xlu0 %v951, 96
          %v992 = vpop.permute.xlu0 %991
          %993 = vrot.lane.b32.xlu0 %v952, 96
          %v994 = vpop.permute.xlu0 %993
          %995 = vrot.lane.b32.xlu0 %v953, 96
          %v996 = vpop.permute.xlu0 %995
          %997 = vrot.lane.b32.xlu0 %v954, 96
          %v998 = vpop.permute.xlu0 %997
          %999 = vrot.lane.b32.xlu0 %v955, 96
          %v1000 = vpop.permute.xlu0 %999
          %1001 = vrot.lane.b32.xlu0 %v956, 96
          %v1002 = vpop.permute.xlu0 %1001
          %1003 = vrot.lane.b32.xlu0 %v957, 96
          %v1004 = vpop.permute.xlu0 %1003
          %1005 = vrot.lane.b32.xlu0 %v958, 96
          %v1006 = vpop.permute.xlu0 %1005
          %v1023 = vadd.f32 %v943, %v976
          %v1024 = vadd.f32 %v944, %v978
          %v1025 = vadd.f32 %v945, %v980
          %v1026 = vadd.f32 %v946, %v982
          %v1027 = vadd.f32 %v947, %v984
          %v1028 = vadd.f32 %v948, %v986
          %v1029 = vadd.f32 %v949, %v988
          %v1030 = vadd.f32 %v950, %v990
          %v1031 = vadd.f32 %v951, %v992
          %v1032 = vadd.f32 %v952, %v994
          %v1033 = vadd.f32 %v953, %v996
          %v1034 = vadd.f32 %v954, %v998
          %v1035 = vadd.f32 %v955, %v1000
          %v1036 = vadd.f32 %v956, %v1002
          %v1037 = vadd.f32 %v957, %v1004
          %v1038 = vadd.f32 %v958, %v1006
          %1039 = vst.msk [vmem:[%s305] sm:$0xff] %vm537, %v1023
          %1040 = vst.msk [vmem:[%s305 + $0x8] sm:$0xff] %vm537, %v1024
          %1041 = vst.msk [vmem:[%s305 + $0x10] sm:$0xff] %vm537, %v1025
          %1042 = vst.msk [vmem:[%s305 + $0x18] sm:$0xff] %vm537, %v1026
          %1043 = vst.msk [vmem:[%s305 + $0x20] sm:$0xff] %vm537, %v1027
          %1044 = vst.msk [vmem:[%s305 + $0x28] sm:$0xff] %vm537, %v1028
          %1045 = vst.msk [vmem:[%s305 + $0x30] sm:$0xff] %vm537, %v1029
          %1046 = vst.msk [vmem:[%s305 + $0x38] sm:$0xff] %vm537, %v1030
          %1047 = vst.msk [vmem:[%s305 + $0x40] sm:$0xff] %vm537, %v1031
          %1048 = vst.msk [vmem:[%s305 + $0x48] sm:$0xff] %vm537, %v1032
          %1049 = vst.msk [vmem:[%s305 + $0x50] sm:$0xff] %vm537, %v1033
          %1050 = vst.msk [vmem:[%s305 + $0x58] sm:$0xff] %vm537, %v1034
          %1051 = vst.msk [vmem:[%s305 + $0x60] sm:$0xff] %vm537, %v1035
          %1052 = vst.msk [vmem:[%s305 + $0x68] sm:$0xff] %vm537, %v1036
          %1053 = vst.msk [vmem:[%s305 + $0x70] sm:$0xff] %vm537, %v1037
          %1054 = vst.msk [vmem:[%s305 + $0x78] sm:$0xff] %vm537, %v1038
        $region52: #{tpu_custom_call.1} parent=39 // pred_fallthru
          _
        %s1055 = smul.u32 16, %s23
        %p1056 = scmp.lt.s32.totalorder %s1055, 47
        %s1057 = scalar_select %p1056, %s1055, 47
        %s1058 = smul.addr %s1057, 8
        %s1059 = scalar_lea.vmem %s5, %s1058
        // Predicated region
        $region53: #{tpu_custom_call.1} parent=39 // pred_check
          %p1060 = pneg %p171
        $region54: #{tpu_custom_call.1} parent=39 // pred_check_branch
          %1062 = sbr.rel (%p1060) target = $region56
        $region55: #{tpu_custom_call.1} parent=39 // pred_region
          %s1063 = smul.u32 16, %s23
        $region56: #{tpu_custom_call.1} parent=39 // pred_fallthru
          _
      $region40: #{tpu_custom_call.1} parent=5 // pred_fallthru
        _
      %p1064 = scmp.le.s32.totalorder 2, %s14
      // Predicated region
      $region57: #{tpu_custom_call.1} parent=5 // pred_check
        %p1065 = pneg %p1064
      $region58: #{tpu_custom_call.1} parent=5 // pred_check_branch
        %1067 = sbr.rel (%p1065) target = $region60
      $region59: #{tpu_custom_call.1} parent=5 // pred_region
        %s1068 = ssub.s32 %s14, 2
        // Predicated region
        $region61: #{tpu_custom_call.1} parent=59 // pred_check
          %p1069 = pneg %p177
        $region62: #{tpu_custom_call.1} parent=59 // pred_check_branch
          %1071 = sbr.rel (%p1069) target = $region64
        $region63: #{tpu_custom_call.1} parent=59 // pred_region
          %s1072 = smul.u32 16, %s25
          %p1073 = scmp.lt.s32.totalorder %s1072, 47
          %s1074 = scalar_select %p1073, %s1072, 47
          %s1075 = smul.addr %s1074, 8
          %s1076 = scalar_lea.vmem %s5, %s1075
        $region64: #{tpu_custom_call.1} parent=59 // pred_fallthru
          _
      $region60: #{tpu_custom_call.1} parent=5 // pred_fallthru
        _
    $region6: #{tpu_custom_call.1} parent=1 // loop_footer
      %s18 = sadd.s32 1, %s14
    $region7: #{tpu_custom_call.1} parent=1 // loop_footer_branch
      %13 = sbr.rel target = $region3
    $region8: #{tpu_custom_call.1} parent=1 // loop_exit
      _
    %1077 = vsyncpa [#allocation4], 1
    %s1078 = scalar_lea.sflag [#allocation4], 1
    %1079 = vsyncpa %s1078, 1

</llo_original>
